<compile_context>
chip_gen: v7x
topology: tpu7x:2x2x1
jax: 0.10.0
libtpu: 0.0.40
codegen_flags: <defaults>
</compile_context>

<pallas_src>
import jax
import jax.numpy as jnp
from jax.experimental import pallas as pl
from jax.experimental.pallas import tpu as pltpu


def transition_block_kernel(x_ref, ss_ref, w_ref, o_ref):
    # x_ref : (1, TH, W, C_in)        activation tile (native dtype)
    # ss_ref: (2, C_in)               row 0 = BN scale, row 1 = BN shift (f32)
    # w_ref : (C_in, 2*C_out)         [W | W] duplicated conv weight (f32)
    # o_ref : (1, TH, 2, W, 2*C_out)  free view of the NHWC 2x-upsampled output
    th = x_ref.shape[1]
    w_img = x_ref.shape[2]
    c_in = x_ref.shape[3]
    two_cout = w_ref.shape[1]

    x = x_ref[0].astype(jnp.float32)                       # (TH, W, C_in)
    ss = ss_ref[...].astype(jnp.float32)                   # (2, C_in)
    z = jnp.maximum(x * ss[0:1, :] + ss[1:2, :], 0.0)      # BN (folded) + ReLU

    # 1x1 transposed conv == matmul over channels; lane dim (C) untouched by the reshape.
    z2 = z.reshape(th * w_img, c_in)                       # (TH*W, C_in)
    # For bf16 models, feed z2/w in bf16 to the MXU (keep preferred_element_type=f32);
    # kept f32 here because the test inputs are f32.
    acc = jnp.dot(z2, w_ref[...].astype(jnp.float32),
                  preferred_element_type=jnp.float32)      # (TH*W, 2*C_out), W-dup built in
    out = acc.reshape(th, w_img, two_cout)                 # (TH, W, 2*C_out)

    # H-duplication of the 2x nearest upsample: broadcast along the (size-2) row-dup axis.
    o_ref[0] = jnp.broadcast_to(out[:, None, :, :],
                                (th, 2, w_img, two_cout)).astype(o_ref.dtype)


def _round_up(v, m):
    return (v + m - 1) // m * m


def _pick_row_tile(H, W, c_in, c_out, itemsize, budget_bytes=12 * 1024 * 1024):
    """Largest divisor of H whose double-buffered VMEM footprint fits the budget."""
    def footprint(th):
        in_tile = th * _round_up(W, 8) * _round_up(c_in, 128) * itemsize
        out_tile = th * 2 * _round_up(W, 8) * _round_up(2 * c_out, 128) * itemsize
        return 2 * (in_tile + out_tile)      # x2: double buffering
    for th in sorted((d for d in range(1, H + 1) if H % d == 0), reverse=True):
        if footprint(th) <= budget_bytes:
            return th
    return 1


def transition_block_forward(x_nchw, gamma, beta, running_mean, running_var, w_conv,
                             eps=1e-5, vmem_limit_bytes=None):
    N, C_in, H, W = x_nchw.shape
    C_out = w_conv.shape[1]
    dtype = x_nchw.dtype

    # Fold BatchNorm (inference) into per-channel scale/shift; single (2, C_in) resident input.
    inv_std = 1.0 / jnp.sqrt(running_var.astype(jnp.float32) + eps)
    scale = gamma.astype(jnp.float32) * inv_std
    shift = beta.astype(jnp.float32) - running_mean.astype(jnp.float32) * scale
    ss = jnp.stack([scale, shift], axis=0)                       # (2, C_in)

    # ConvTranspose2d weight (C_in, C_out, 1, 1) -> matmul weight; duplicate columns so the
    # matmul itself performs the W-direction nearest-neighbor duplication.
    w2d = w_conv.reshape(C_in, C_out).astype(jnp.float32)
    w_dup = jnp.concatenate([w2d, w2d], axis=1)                  # (C_in, 2*C_out)

    # Layout glue: NCHW -> NHWC (native dtype, no upcast). See TODO(synk) above.
    x_nhwc = jnp.transpose(x_nchw, (0, 2, 3, 1))                 # (N, H, W, C_in)

    TH = _pick_row_tile(H, W, C_in, C_out, jnp.dtype(dtype).itemsize)
    grid = (N, H // TH)

    cp_kwargs = dict(dimension_semantics=("parallel", "parallel"))
    if vmem_limit_bytes is not None:
        cp_kwargs["vmem_limit_bytes"] = vmem_limit_bytes

    out5 = pl.pallas_call(
        transition_block_kernel,
        out_shape=jax.ShapeDtypeStruct((N, H, 2, W, 2 * C_out), dtype),
        grid_spec=pltpu.PrefetchScalarGridSpec(
            num_scalar_prefetch=0,
            grid=grid,
            in_specs=[
                pl.BlockSpec((1, TH, W, C_in), lambda n, h: (n, h, 0, 0)),   # activations
                pl.BlockSpec((2, C_in), lambda n, h: (0, 0)),                # BN scale/shift
                pl.BlockSpec((C_in, 2 * C_out), lambda n, h: (0, 0)),        # dup'd weight
            ],
            out_specs=pl.BlockSpec((1, TH, 2, W, 2 * C_out),
                                   lambda n, h: (n, h, 0, 0, 0)),
        ),
        compiler_params=pltpu.CompilerParams(**cp_kwargs),
    )(x_nhwc, ss, w_dup)

    # Free reshape back to NHWC, then one layout pass back to NCHW.
    out_nhwc = out5.reshape(N, 2 * H, 2 * W, C_out)
    return jnp.transpose(out_nhwc, (0, 3, 1, 2))                 # (N, C_out, 2H, 2W)


def _reference(x_nchw, gamma, beta, running_mean, running_var, w_conv, eps=1e-5):
    # Pure-JAX reference reproducing the PyTorch forward (eval mode, droprate=0).
    sc = gamma / jnp.sqrt(running_var + eps)
    sh = beta - running_mean * sc
    z = x_nchw * sc[None, :, None, None] + sh[None, :, None, None]
    z = jnp.maximum(z, 0.0)
    w2d = w_conv.reshape(w_conv.shape[0], w_conv.shape[1])       # (C_in, C_out)
    out = jnp.einsum('nihw,io->nohw', z, w2d)
    out = jnp.repeat(jnp.repeat(out, 2, axis=2), 2, axis=3)      # nearest 2x
    return out


if __name__ == "__main__":
    key = jax.random.PRNGKey(0)
    k_x, k_w = jax.random.split(key)

    N, C_in, C_out, H, W = 2, 8, 4, 16, 16   # in_planes=8, out_planes=4

    x = jax.random.normal(k_x, (N, C_in, H, W), dtype=jnp.float32)

    # Deterministic parameters (module __init__ shapes).
    gamma = 1.0 + 0.1 * jnp.arange(C_in, dtype=jnp.float32)          # bn1.weight
    beta = 0.05 * jnp.arange(C_in, dtype=jnp.float32)                # bn1.bias
    running_mean = 0.01 * jnp.arange(C_in, dtype=jnp.float32)        # bn1.running_mean
    running_var = 1.0 + 0.02 * jnp.arange(C_in, dtype=jnp.float32)   # bn1.running_var
    w_conv = 0.1 * jax.random.normal(k_w, (C_in, C_out, 1, 1), dtype=jnp.float32)  # conv1.weight

    out = transition_block_forward(x, gamma, beta, running_mean, running_var, w_conv)
    out = jax.block_until_ready(out)

    ref = _reference(x, gamma, beta, running_mean, running_var, w_conv)
    assert out.shape == (N, C_out, 2 * H, 2 * W), out.shape
    assert jnp.allclose(out, ref, atol=1e-4, rtol=1e-4), float(jnp.max(jnp.abs(out - ref)))

    print("KERNEL_OK")
</pallas_src>

<mosaic_0001>
module attributes {stable_mosaic.version = 11 : i64} {
  func.func @transition_block_kernel(%arg0: i32, %arg1: i32, %arg2: memref<1x16x16x8xf32, #tpu.memory_space<vmem>>, %arg3: memref<2x8xf32, #tpu.memory_space<vmem>>, %arg4: memref<8x8xf32, #tpu.memory_space<vmem>>, %arg5: memref<1x16x2x16x8xf32, #tpu.memory_space<vmem>>) attributes {dimension_semantics = [#tpu.dimension_semantics<parallel>, #tpu.dimension_semantics<parallel>], iteration_bounds = array<i64: 2, 1>, scalar_prefetch = 0 : i64, scratch_operands = 0 : i64, tpu.core_type = #tpu.core_type<tc>, window_params = [{transform_indices = @transform_0, window_bounds = array<i64: 1, 16, 16, 8>}, {pipeline_mode = #tpu.pipeline_mode<synchronous>, transform_indices = @transform_1, window_bounds = array<i64: 2, 8>}, {pipeline_mode = #tpu.pipeline_mode<synchronous>, transform_indices = @transform_2, window_bounds = array<i64: 8, 8>}, {transform_indices = @transform_3, window_bounds = array<i64: 1, 16, 2, 16, 8>}]} {
    %c0 = arith.constant 0 : index
    %c0_0 = arith.constant 0 : index
    %c0_1 = arith.constant 0 : index
    %c0_2 = arith.constant 0 : index
    %0 = vector.load %arg2[%c0, %c0_0, %c0_1, %c0_2] : memref<1x16x16x8xf32, #tpu.memory_space<vmem>>, vector<1x16x16x8xf32>
    %1 = vector.shape_cast %0 : vector<1x16x16x8xf32> to vector<16x16x8xf32>
    %c0_3 = arith.constant 0 : index
    %c0_4 = arith.constant 0 : index
    %2 = vector.load %arg3[%c0_3, %c0_4] : memref<2x8xf32, #tpu.memory_space<vmem>>, vector<2x8xf32>
    %3 = vector.extract_strided_slice %2 {offsets = [0, 0], sizes = [1, 8], strides = [1, 1]} : vector<2x8xf32> to vector<1x8xf32>
    %4 = vector.shape_cast %3 : vector<1x8xf32> to vector<1x1x8xf32>
    %5 = vector.broadcast %4 : vector<1x1x8xf32> to vector<16x16x8xf32>
    %6 = arith.mulf %1, %5 : vector<16x16x8xf32>
    %7 = vector.extract_strided_slice %2 {offsets = [1, 0], sizes = [1, 8], strides = [1, 1]} : vector<2x8xf32> to vector<1x8xf32>
    %8 = vector.shape_cast %7 : vector<1x8xf32> to vector<1x1x8xf32>
    %9 = vector.broadcast %8 : vector<1x1x8xf32> to vector<16x16x8xf32>
    %10 = arith.addf %6, %9 : vector<16x16x8xf32>
    %cst = arith.constant 0.000000e+00 : f32
    %11 = vector.broadcast %cst : f32 to vector<16x16x8xf32>
    %12 = arith.maximumf %10, %11 : vector<16x16x8xf32>
    %13 = vector.shape_cast %12 : vector<16x16x8xf32> to vector<256x8xf32>
    %c0_5 = arith.constant 0 : index
    %c0_6 = arith.constant 0 : index
    %14 = vector.load %arg4[%c0_5, %c0_6] : memref<8x8xf32, #tpu.memory_space<vmem>>, vector<8x8xf32>
    %cst_7 = arith.constant dense<0.000000e+00> : vector<256x8xf32>
    %15 = tpu.matmul %13, %14, %cst_7 {dimension_numbers = #tpu.dot_dimension_numbers<[1], [0], [0], [1], [0, 0, 1, 1], [], []>} : vector<256x8xf32>, vector<8x8xf32>, vector<256x8xf32> -> vector<256x8xf32>
    %16 = vector.shape_cast %15 : vector<256x8xf32> to vector<16x16x8xf32>
    %17 = vector.shape_cast %16 : vector<16x16x8xf32> to vector<16x1x16x8xf32>
    %18 = vector.shape_cast %17 : vector<16x1x16x8xf32> to vector<16x1x16x8xf32>
    %19 = vector.broadcast %18 : vector<16x1x16x8xf32> to vector<16x2x16x8xf32>
    %c0_8 = arith.constant 0 : index
    %c0_9 = arith.constant 0 : index
    %c0_10 = arith.constant 0 : index
    %c0_11 = arith.constant 0 : index
    %c0_12 = arith.constant 0 : index
    %20 = vector.load %arg5[%c0_8, %c0_9, %c0_10, %c0_11, %c0_12] : memref<1x16x2x16x8xf32, #tpu.memory_space<vmem>>, vector<1x16x2x16x8xf32>
    %21 = vector.shape_cast %20 : vector<1x16x2x16x8xf32> to vector<16x2x16x8xf32>
    %22 = vector.shape_cast %19 : vector<16x2x16x8xf32> to vector<1x16x2x16x8xf32>
    tpu.vector_store %arg5[%c0_8, %c0_9, %c0_10, %c0_11, %c0_12], %22 {strides = array<i32>} : memref<1x16x2x16x8xf32, #tpu.memory_space<vmem>>, vector<1x16x2x16x8xf32>,
    return
  }
  func.func @transform_0(%arg0: i32, %arg1: i32) -> (i32, i32, i32, i32) {
    %c0_i32 = arith.constant 0 : i32
    %c0_i32_0 = arith.constant 0 : i32
    %c0_i32_1 = arith.constant 0 : i32
    return %arg0, %arg1, %c0_i32, %c0_i32_0 : i32, i32, i32, i32
  }
  func.func @transform_1(%arg0: i32, %arg1: i32) -> (i32, i32) {
    %c0_i32 = arith.constant 0 : i32
    %c0_i32_0 = arith.constant 0 : i32
    %c0_i32_1 = arith.constant 0 : i32
    return %c0_i32, %c0_i32_0 : i32, i32
  }
  func.func @transform_2(%arg0: i32, %arg1: i32) -> (i32, i32) {
    %c0_i32 = arith.constant 0 : i32
    %c0_i32_0 = arith.constant 0 : i32
    %c0_i32_1 = arith.constant 0 : i32
    return %c0_i32, %c0_i32_0 : i32, i32
  }
  func.func @transform_3(%arg0: i32, %arg1: i32) -> (i32, i32, i32, i32, i32) {
    %c0_i32 = arith.constant 0 : i32
    %c0_i32_0 = arith.constant 0 : i32
    %c0_i32_1 = arith.constant 0 : i32
    %c0_i32_2 = arith.constant 0 : i32
    return %arg0, %arg1, %c0_i32, %c0_i32_0, %c0_i32_1 : i32, i32, i32, i32, i32
  }
}

</mosaic_0001>

<llo_original>
// kernel: tpu_custom_call.1
$region0: #{tpu_custom_call.1}
  #allocation0 [shape = 'u32[]', space=smem, size = 0x4, offset = 0x4, fixed_abs, tag = 'smem constant byte address 0x4 - core index']
  #allocation1 [shape = 'u32[144,128]{1,0:T(1,128)}', space=vmem, size = 0x12000, scoped, tag = 'internal scratch']
  %s0 = inlined_call_operand.vmem [shape: f32[2,16,16,8], index: 0, kind: input, shape index: {}]
  %s1 = inlined_call_operand.vmem [shape: f32[2,8], index: 1, kind: input, shape index: {}]
  %s2 = inlined_call_operand.vmem [shape: f32[8,8], index: 2, kind: input, shape index: {}]
  %s3 = inlined_call_operand.vmem [shape: f32[2,16,2,16,8], index: 3, kind: output, shape index: {}]
  %s4 = sld [smem:[#allocation0]]
  $region45: #{tpu_custom_call.1} parent=0
    _
  %s6 = ssub.s32 1, %s4
  %s7 = scalar_select 0, %s6, %s4
  loop: start=0, step=1, limit=4
  $region2: #{tpu_custom_call.1} parent=0 // loop_pre_header
    _
  $region3: #{tpu_custom_call.1} parent=0 // loop_header
    %s9 = sphi 0, %s13
    %p10 = scmp.ge.s32.totalorder %s9, 4
    %s16 = sphi 0, %s28
    %s17 = sphi 0, %s24
    %s18 = sphi 0, %s16
    %s19 = sphi 0, %s17
    %s20 = sphi 0, %s18
    %s21 = sphi 0, %s19
    %s33 = sphi 0, %s35
    %s36 = sphi 0, %s33
    %s37 = sphi 0, %s36
    %s53 = sphi 0, %s37
    %s57 = sphi 0, %s57
    %s59 = sphi 0, %s57
    %s60 = sphi 0, %s59
    %s74 = sphi 0, %s60
    %s78 = sphi 0, %s78
    %s80 = sphi 0, %s78
    %s81 = sphi 0, %s80
    %s95 = sphi 0, %s81
    %s103 = sphi 0, %s105
    %s106 = sphi 0, %s103
    %s107 = sphi 0, %s106
    %s123 = sphi 0, %s107
  $region4: #{tpu_custom_call.1} parent=0 // loop_header_branch
    %12 = sbr.rel (%p10) target = $region8
  $region5: #{tpu_custom_call.1} parent=0 // loop_body
    %s14 = ssub.s32 %s9, 1
    %s15 = ssub.s32 %s9, 2
    %s22 = sadd.s32 1, %s17
    %p23 = scmp.ge.s32.totalorder %s22, 1
    %s24 = scalar_select %p23, 0, %s22
    %s25 = sadd.s32 1, %s16
    %s26 = scalar_select %p23, %s25, %s16
    %p27 = scmp.ge.s32.totalorder %s26, 2
    %s28 = scalar_select %p27, 0, %s26
    %s29 = ssub.s32 %s16, %s28
    %s30 = ssub.s32 %s17, %s24
    %s31 = sor.u32 %s29, %s30
    %p32 = scmp.eq.s32.totalorder %s31, 0
    %s34 = sadd.s32 %s33, 1
    %s35 = scalar_select %p32, %s33, %s34
    %p38 = pneg %p32
    %p39 = scmp.eq.s32.totalorder %s9, 1
    %p40 = por %p38, %p39
    %p41 = scmp.ne.s32.totalorder %s33, %s36
    %p42 = scmp.eq.s32.totalorder %s9, 0
    %p43 = por %p41, %p42
    %p44 = scmp.ne.s32.totalorder %s33, %s36
    %p45 = scmp.eq.s32.totalorder %s14, 1
    %p46 = por %p44, %p45
    %p47 = scmp.ne.s32.totalorder %s36, %s37
    %p48 = scmp.eq.s32.totalorder %s14, 0
    %p49 = por %p47, %p48
    %p50 = scmp.ne.s32.totalorder %s36, %s37
    %p51 = scmp.eq.s32.totalorder %s15, 1
    %p52 = por %p50, %p51
    %p54 = scmp.ne.s32.totalorder %s37, %s53
    %p55 = scmp.eq.s32.totalorder %s15, 0
    %p56 = por %p54, %p55
    %s58 = sadd.s32 %s57, 1
    %p61 = scmp.eq.s32.totalorder %s9, 1
    %p62 = scmp.ne.s32.totalorder %s57, %s59
    %p63 = scmp.eq.s32.totalorder %s9, 0
    %p64 = por %p62, %p63
    %p65 = scmp.ne.s32.totalorder %s57, %s59
    %p66 = scmp.eq.s32.totalorder %s14, 1
    %p67 = por %p65, %p66
    %p68 = scmp.ne.s32.totalorder %s59, %s60
    %p69 = scmp.eq.s32.totalorder %s14, 0
    %p70 = por %p68, %p69
    %p71 = scmp.ne.s32.totalorder %s59, %s60
    %p72 = scmp.eq.s32.totalorder %s15, 1
    %p73 = por %p71, %p72
    %p75 = scmp.ne.s32.totalorder %s60, %s74
    %p76 = scmp.eq.s32.totalorder %s15, 0
    %p77 = por %p75, %p76
    %s79 = sadd.s32 %s78, 1
    %p82 = scmp.eq.s32.totalorder %s9, 1
    %p83 = scmp.ne.s32.totalorder %s78, %s80
    %p84 = scmp.eq.s32.totalorder %s9, 0
    %p85 = por %p83, %p84
    %p86 = scmp.ne.s32.totalorder %s78, %s80
    %p87 = scmp.eq.s32.totalorder %s14, 1
    %p88 = por %p86, %p87
    %p89 = scmp.ne.s32.totalorder %s80, %s81
    %p90 = scmp.eq.s32.totalorder %s14, 0
    %p91 = por %p89, %p90
    %p92 = scmp.ne.s32.totalorder %s80, %s81
    %p93 = scmp.eq.s32.totalorder %s15, 1
    %p94 = por %p92, %p93
    %p96 = scmp.ne.s32.totalorder %s81, %s95
    %p97 = scmp.eq.s32.totalorder %s15, 0
    %p98 = por %p96, %p97
    %s99 = ssub.s32 %s16, %s28
    %s100 = ssub.s32 %s17, %s24
    %s101 = sor.u32 %s99, %s100
    %p102 = scmp.eq.s32.totalorder %s101, 0
    %s104 = sadd.s32 %s103, 1
    %s105 = scalar_select %p102, %s103, %s104
    %p108 = pneg %p102
    %p109 = scmp.eq.s32.totalorder %s9, 1
    %p110 = por %p108, %p109
    %p111 = scmp.ne.s32.totalorder %s103, %s106
    %p112 = scmp.eq.s32.totalorder %s9, 0
    %p113 = por %p111, %p112
    %p114 = scmp.ne.s32.totalorder %s103, %s106
    %p115 = scmp.eq.s32.totalorder %s14, 1
    %p116 = por %p114, %p115
    %p117 = scmp.ne.s32.totalorder %s106, %s107
    %p118 = scmp.eq.s32.totalorder %s14, 0
    %p119 = por %p117, %p118
    %p120 = scmp.ne.s32.totalorder %s106, %s107
    %p121 = scmp.eq.s32.totalorder %s15, 1
    %p122 = por %p120, %p121
    %p124 = scmp.ne.s32.totalorder %s107, %s123
    %p125 = scmp.eq.s32.totalorder %s15, 0
    %p126 = por %p124, %p125
    %p127 = scmp.le.s32.totalorder 1, %s9
    %p128 = scmp.lt.s32.totalorder %s9, 3
    %p129 = pnand %p127, %p128
    %p130 = pneg %p129
    // Predicated region
    $region9: #{tpu_custom_call.1} parent=5 // pred_check
      _
    $region10: #{tpu_custom_call.1} parent=5 // pred_check_branch
      %132 = sbr.rel (%p129) target = $region12
    $region11: #{tpu_custom_call.1} parent=5 // pred_region
      %s133 = ssub.s32 %s9, 1
      // Predicated region
      $region13: #{tpu_custom_call.1} parent=11 // pred_check
        %p134 = pneg %p70
      $region14: #{tpu_custom_call.1} parent=11 // pred_check_branch
        %136 = sbr.rel (%p134) target = $region16
      $region15: #{tpu_custom_call.1} parent=11 // pred_region
        _
      $region16: #{tpu_custom_call.1} parent=11 // pred_fallthru
        _
      // Predicated region
      $region17: #{tpu_custom_call.1} parent=11 // pred_check
        %p137 = pneg %p91
      $region18: #{tpu_custom_call.1} parent=11 // pred_check_branch
        %139 = sbr.rel (%p137) target = $region20
      $region19: #{tpu_custom_call.1} parent=11 // pred_region
        _
      $region20: #{tpu_custom_call.1} parent=11 // pred_fallthru
        _
    $region12: #{tpu_custom_call.1} parent=5 // pred_fallthru
      _
    %p140 = scmp.lt.s32.totalorder %s9, 2
    // Predicated region
    $region21: #{tpu_custom_call.1} parent=5 // pred_check
      %p141 = pneg %p140
    $region22: #{tpu_custom_call.1} parent=5 // pred_check_branch
      %143 = sbr.rel (%p141) target = $region24
    $region23: #{tpu_custom_call.1} parent=5 // pred_region
      // Predicated region
      $region25: #{tpu_custom_call.1} parent=23 // pred_check
        %p144 = pneg %p43
      $region26: #{tpu_custom_call.1} parent=23 // pred_check_branch
        %146 = sbr.rel (%p144) target = $region28
      $region27: #{tpu_custom_call.1} parent=23 // pred_region
        %s147 = smul.u32 16, %s17
        %p148 = scmp.lt.s32.totalorder %s16, 1
        %s149 = scalar_select %p148, %s16, 1
        %p150 = scmp.lt.s32.totalorder %s147, 15
        %s151 = scalar_select %p150, %s147, 15
        %s152 = smul.addr %s151, 2
        %s153 = smul.addr %s149, 32
        %s154 = sadd.s32 %s152, %s153
        %s155 = smul.addr %s154, 8
        %s156 = scalar_lea.vmem %s0, %s155
        %s157 = smul.u32 16, %s17
      $region28: #{tpu_custom_call.1} parent=23 // pred_fallthru
        _
    $region24: #{tpu_custom_call.1} parent=5 // pred_fallthru
      _
    %p158 = scmp.le.s32.totalorder 1, %s9
    %p159 = scmp.lt.s32.totalorder %s9, 3
    %p160 = pnand %p158, %p159
    %p161 = pneg %p160
    // Predicated region
    $region29: #{tpu_custom_call.1} parent=5 // pred_check
      _
    $region30: #{tpu_custom_call.1} parent=5 // pred_check_branch
      %163 = sbr.rel (%p160) target = $region32
    $region31: #{tpu_custom_call.1} parent=5 // pred_region
      %s164 = ssub.s32 %s9, 1
      %s165 = smul.u32 16, %s19
      %p166 = scmp.lt.s32.totalorder %s18, 1
      %s167 = scalar_select %p166, %s18, 1
      %p168 = scmp.lt.s32.totalorder %s165, 15
      %s169 = scalar_select %p168, %s165, 15
      %s170 = smul.addr %s169, 2
      %s171 = smul.addr %s167, 32
      %s172 = sadd.s32 %s170, %s171
      %s173 = smul.addr %s172, 8
      %s174 = scalar_lea.vmem %s0, %s173
      %p175 = pneg %p49
      %p176 = pneg %p46
      %p177 = pneg %p70
      %p178 = pneg %p67
      %p179 = pneg %p91
      %p180 = pneg %p88
      %p181 = pneg %p119
      %p182 = pneg %p116
      %s183 = smul.u32 16, %s19
      %p184 = scmp.lt.s32.totalorder %s18, 1
      %s185 = scalar_select %p184, %s18, 1
      %p186 = scmp.lt.s32.totalorder %s183, 15
      %s187 = scalar_select %p186, %s183, 15
      %s188 = smul.addr %s187, 4
      %s189 = smul.addr %s185, 64
      %s190 = sadd.s32 %s188, %s189
      %s191 = smul.addr %s190, 8
      %s192 = scalar_lea.vmem %s3, %s191
      %s193 = smul.u32 16, %s19
      %p194 = scmp.lt.s32.totalorder %s18, 1
      %s195 = scalar_select %p194, %s18, 1
      %p196 = scmp.lt.s32.totalorder %s193, 15
      %s197 = scalar_select %p196, %s193, 15
      %s198 = smul.addr %s197, 2
      %s199 = smul.addr %s195, 32
      %s200 = sadd.s32 %s198, %s199
      %s201 = smul.addr %s200, 8
      %s202 = scalar_lea.vmem %s0, %s201
      %s203 = smul.u32 16, %s19
      %s204 = smul.u32 16, %s19
      %p205 = scmp.lt.s32.totalorder %s18, 1
      %s206 = scalar_select %p205, %s18, 1
      %p207 = scmp.lt.s32.totalorder %s204, 15
      %s208 = scalar_select %p207, %s204, 15
      %s209 = smul.addr %s208, 4
      %s210 = smul.addr %s206, 64
      %s211 = sadd.s32 %s209, %s210
      %s212 = smul.addr %s211, 8
      %s213 = scalar_lea.vmem %s3, %s212
      %s214 = smul.u32 16, %s19
      %v215 = vld [vmem:[%s202] sm:$0xff]
      %v216 = vld [vmem:[%s202 + $0x8] sm:$0xff]
      %v217 = vld [vmem:[%s202 + $0x10] sm:$0xff]
      %v218 = vld [vmem:[%s202 + $0x18] sm:$0xff]
      %v219 = vld [vmem:[%s202 + $0x20] sm:$0xff]
      %v220 = vld [vmem:[%s202 + $0x28] sm:$0xff]
      %v221 = vld [vmem:[%s202 + $0x30] sm:$0xff]
      %v222 = vld [vmem:[%s202 + $0x38] sm:$0xff]
      %v223 = vld [vmem:[%s202 + $0x40] sm:$0xff]
      %v224 = vld [vmem:[%s202 + $0x48] sm:$0xff]
      %v225 = vld [vmem:[%s202 + $0x50] sm:$0xff]
      %v226 = vld [vmem:[%s202 + $0x58] sm:$0xff]
      %v227 = vld [vmem:[%s202 + $0x60] sm:$0xff]
      %v228 = vld [vmem:[%s202 + $0x68] sm:$0xff]
      %v229 = vld [vmem:[%s202 + $0x70] sm:$0xff]
      %v230 = vld [vmem:[%s202 + $0x78] sm:$0xff]
      %v231 = vld [vmem:[%s202 + $0x80] sm:$0xff]
      %v232 = vld [vmem:[%s202 + $0x88] sm:$0xff]
      %v233 = vld [vmem:[%s202 + $0x90] sm:$0xff]
      %v234 = vld [vmem:[%s202 + $0x98] sm:$0xff]
      %v235 = vld [vmem:[%s202 + $0xa0] sm:$0xff]
      %v236 = vld [vmem:[%s202 + $0xa8] sm:$0xff]
      %v237 = vld [vmem:[%s202 + $0xb0] sm:$0xff]
      %v238 = vld [vmem:[%s202 + $0xb8] sm:$0xff]
      %v239 = vld [vmem:[%s202 + $0xc0] sm:$0xff]
      %v240 = vld [vmem:[%s202 + $0xc8] sm:$0xff]
      %v241 = vld [vmem:[%s202 + $0xd0] sm:$0xff]
      %v242 = vld [vmem:[%s202 + $0xd8] sm:$0xff]
      %v243 = vld [vmem:[%s202 + $0xe0] sm:$0xff]
      %v244 = vld [vmem:[%s202 + $0xe8] sm:$0xff]
      %v245 = vld [vmem:[%s202 + $0xf0] sm:$0xff]
      %v246 = vld [vmem:[%s202 + $0xf8] sm:$0xff]
      %v247 = vld [vmem:[%s1] sm:$0x3]
      %v248 = vlaneseq
      %v249 = vshrl.u32 %v248, 7
      %v250 = vsub.s32 0, %v249
      %v251 = vrot.slane %v247, %v250
      %v252 = vmul.f32 %v215, %v251
      %v253 = vmul.f32 %v216, %v251
      %v254 = vmul.f32 %v217, %v251
      %v255 = vmul.f32 %v218, %v251
      %v256 = vmul.f32 %v219, %v251
      %v257 = vmul.f32 %v220, %v251
      %v258 = vmul.f32 %v221, %v251
      %v259 = vmul.f32 %v222, %v251
      %v260 = vmul.f32 %v223, %v251
      %v261 = vmul.f32 %v224, %v251
      %v262 = vmul.f32 %v225, %v251
      %v263 = vmul.f32 %v226, %v251
      %v264 = vmul.f32 %v227, %v251
      %v265 = vmul.f32 %v228, %v251
      %v266 = vmul.f32 %v229, %v251
      %v267 = vmul.f32 %v230, %v251
      %v268 = vmul.f32 %v231, %v251
      %v269 = vmul.f32 %v232, %v251
      %v270 = vmul.f32 %v233, %v251
      %v271 = vmul.f32 %v234, %v251
      %v272 = vmul.f32 %v235, %v251
      %v273 = vmul.f32 %v236, %v251
      %v274 = vmul.f32 %v237, %v251
      %v275 = vmul.f32 %v238, %v251
      %v276 = vmul.f32 %v239, %v251
      %v277 = vmul.f32 %v240, %v251
      %v278 = vmul.f32 %v241, %v251
      %v279 = vmul.f32 %v242, %v251
      %v280 = vmul.f32 %v243, %v251
      %v281 = vmul.f32 %v244, %v251
      %v282 = vmul.f32 %v245, %v251
      %v283 = vmul.f32 %v246, %v251
      %v284 = vlaneseq
      %v285 = vshrl.u32 %v284, 7
      %v286 = vsub.s32 1, %v285
      %v287 = vrot.slane %v247, %v286
      %v288 = vadd.f32 %v252, %v287
      %v289 = vadd.f32 %v253, %v287
      %v290 = vadd.f32 %v254, %v287
      %v291 = vadd.f32 %v255, %v287
      %v292 = vadd.f32 %v256, %v287
      %v293 = vadd.f32 %v257, %v287
      %v294 = vadd.f32 %v258, %v287
      %v295 = vadd.f32 %v259, %v287
      %v296 = vadd.f32 %v260, %v287
      %v297 = vadd.f32 %v261, %v287
      %v298 = vadd.f32 %v262, %v287
      %v299 = vadd.f32 %v263, %v287
      %v300 = vadd.f32 %v264, %v287
      %v301 = vadd.f32 %v265, %v287
      %v302 = vadd.f32 %v266, %v287
      %v303 = vadd.f32 %v267, %v287
      %v304 = vadd.f32 %v268, %v287
      %v305 = vadd.f32 %v269, %v287
      %v306 = vadd.f32 %v270, %v287
      %v307 = vadd.f32 %v271, %v287
      %v308 = vadd.f32 %v272, %v287
      %v309 = vadd.f32 %v273, %v287
      %v310 = vadd.f32 %v274, %v287
      %v311 = vadd.f32 %v275, %v287
      %v312 = vadd.f32 %v276, %v287
      %v313 = vadd.f32 %v277, %v287
      %v314 = vadd.f32 %v278, %v287
      %v315 = vadd.f32 %v279, %v287
      %v316 = vadd.f32 %v280, %v287
      %v317 = vadd.f32 %v281, %v287
      %v318 = vadd.f32 %v282, %v287
      %v319 = vadd.f32 %v283, %v287
      %v320 = vmax.f32 %v288, 0.0
      %v321 = vmax.f32 %v289, 0.0
      %v322 = vmax.f32 %v290, 0.0
      %v323 = vmax.f32 %v291, 0.0
      %v324 = vmax.f32 %v292, 0.0
      %v325 = vmax.f32 %v293, 0.0
      %v326 = vmax.f32 %v294, 0.0
      %v327 = vmax.f32 %v295, 0.0
      %v328 = vmax.f32 %v296, 0.0
      %v329 = vmax.f32 %v297, 0.0
      %v330 = vmax.f32 %v298, 0.0
      %v331 = vmax.f32 %v299, 0.0
      %v332 = vmax.f32 %v300, 0.0
      %v333 = vmax.f32 %v301, 0.0
      %v334 = vmax.f32 %v302, 0.0
      %v335 = vmax.f32 %v303, 0.0
      %v336 = vmax.f32 %v304, 0.0
      %v337 = vmax.f32 %v305, 0.0
      %v338 = vmax.f32 %v306, 0.0
      %v339 = vmax.f32 %v307, 0.0
      %v340 = vmax.f32 %v308, 0.0
      %v341 = vmax.f32 %v309, 0.0
      %v342 = vmax.f32 %v310, 0.0
      %v343 = vmax.f32 %v311, 0.0
      %v344 = vmax.f32 %v312, 0.0
      %v345 = vmax.f32 %v313, 0.0
      %v346 = vmax.f32 %v314, 0.0
      %v347 = vmax.f32 %v315, 0.0
      %v348 = vmax.f32 %v316, 0.0
      %v349 = vmax.f32 %v317, 0.0
      %v350 = vmax.f32 %v318, 0.0
      %v351 = vmax.f32 %v319, 0.0
      %v352 = vld [vmem:[%s2] sm:$0xff]
      %vm353 = vcmask 64512
      %v355 = vsel %vm353, %v320, 0
      %v358 = vsel %vm353, %v321, 0
      %v361 = vsel %vm353, %v322, 0
      %v364 = vsel %vm353, %v323, 0
      %v367 = vsel %vm353, %v324, 0
      %v370 = vsel %vm353, %v325, 0
      %v373 = vsel %vm353, %v326, 0
      %v376 = vsel %vm353, %v327, 0
      %v379 = vsel %vm353, %v328, 0
      %v382 = vsel %vm353, %v329, 0
      %v385 = vsel %vm353, %v330, 0
      %v388 = vsel %vm353, %v331, 0
      %v391 = vsel %vm353, %v332, 0
      %v394 = vsel %vm353, %v333, 0
      %v397 = vsel %vm353, %v334, 0
      %v400 = vsel %vm353, %v335, 0
      %v403 = vsel %vm353, %v336, 0
      %v406 = vsel %vm353, %v337, 0
      %v409 = vsel %vm353, %v338, 0
      %v412 = vsel %vm353, %v339, 0
      %v415 = vsel %vm353, %v340, 0
      %v418 = vsel %vm353, %v341, 0
      %v421 = vsel %vm353, %v342, 0
      %v424 = vsel %vm353, %v343, 0
      %v427 = vsel %vm353, %v344, 0
      %v430 = vsel %vm353, %v345, 0
      %v433 = vsel %vm353, %v346, 0
      %v436 = vsel %vm353, %v347, 0
      %v439 = vsel %vm353, %v348, 0
      %v442 = vsel %vm353, %v349, 0
      %v445 = vsel %vm353, %v350, 0
      %v448 = vsel %vm353, %v351, 0
      %450 = vmatprep.subr.mxu0 0.0
      %451 = vmatpush1.msra.mxu0 %v352
      %452 = vmatprep.subr.mxu0 0.0
      %453 = vmatpush1.msra.mxu0 0.0
      %454 = vmatprep.subr.mxu0 0.0
      %455 = vmatpush1.msra.mxu0 0.0
      %456 = vmatprep.subr.mxu0 0.0
      %457 = vmatpush1.msra.mxu0 0.0
      %458 = vmatprep.subr.mxu0 0.0
      %459 = vmatpush1.msra.mxu0 0.0
      %460 = vmatprep.subr.mxu0 0.0
      %461 = vmatpush1.msra.mxu0 0.0
      %462 = vmatprep.subr.mxu0 0.0
      %463 = vmatpush1.msra.mxu0 0.0
      %464 = vmatprep.subr.mxu0 0.0
      %465 = vmatpush1.msra.mxu0 0.0
      %466 = vmatprep.subr.mxu0 0.0
      %467 = vmatpush1.msra.mxu0 0.0
      %468 = vmatprep.subr.mxu0 0.0
      %469 = vmatpush1.msra.mxu0 0.0
      %470 = vmatprep.subr.mxu0 0.0
      %471 = vmatpush1.msra.mxu0 0.0
      %472 = vmatprep.subr.mxu0 0.0
      %473 = vmatpush1.msra.mxu0 0.0
      %474 = vmatprep.subr.mxu0 0.0
      %475 = vmatpush1.msra.mxu0 0.0
      %476 = vmatprep.subr.mxu0 0.0
      %477 = vmatpush1.msra.mxu0 0.0
      %478 = vmatprep.subr.mxu0 0.0
      %479 = vmatpush1.msra.mxu0 0.0
      %480 = vmatprep.subr.mxu0 0.0
      %481 = vmatpush1.msra.mxu0 0.0
      %482 = vmatprep.subr.mxu0 0.0
      %483 = vmatpush1.msra.mxu0 0.0
      %484 = vmatprep.subr.mxu0 0.0
      %485 = vmatpush1.msra.mxu0 0.0
      %486 = vmatprep.subr.mxu0 0.0
      %487 = vmatpush1.msra.mxu0 0.0
      %488 = vmatprep.subr.mxu0 0.0
      %489 = vmatpush1.msra.mxu0 0.0
      %490 = vmatprep.subr.mxu0 0.0
      %491 = vmatpush1.msra.mxu0 0.0
      %492 = vmatprep.subr.mxu0 0.0
      %493 = vmatpush1.msra.mxu0 0.0
      %494 = vmatprep.subr.mxu0 0.0
      %495 = vmatpush1.msra.mxu0 0.0
      %496 = vmatprep.subr.mxu0 0.0
      %497 = vmatpush1.msra.mxu0 0.0
      %498 = vmatprep.subr.mxu0 0.0
      %499 = vmatpush1.msra.mxu0 0.0
      %500 = vmatprep.subr.mxu0 0.0
      %501 = vmatpush1.msra.mxu0 0.0
      %502 = vmatprep.subr.mxu0 0.0
      %503 = vmatpush1.msra.mxu0 0.0
      %504 = vmatprep.subr.mxu0 0.0
      %505 = vmatpush1.msra.mxu0 0.0
      %506 = vmatprep.subr.mxu0 0.0
      %507 = vmatpush1.msra.mxu0 0.0
      %508 = vmatprep.subr.mxu0 0.0
      %509 = vmatpush1.msra.mxu0 0.0
      %510 = vmatprep.subr.mxu0 0.0
      %511 = vmatpush1.msra.mxu0 0.0
      %512 = vmatprep.subr.mxu0 0.0
      %513 = vmatpush1.msra.mxu0 0.0
      %514 = vmatprep.mubr.f32.mxu0 0.0
      %515 = vmatmul.mubr.f32.gmra.mrb[0].mxu0 %v355
      %v516 = vpop.f32.mrb[0].mxu0
      %v517 = vadd.f32 0.0, %v516
      %v518 = vpop.f32.mrb[0].mxu0
      %519 = vmatprep.mubr.f32.mxu0 0.0
      %520 = vmatmul.mubr.f32.gmra.mrb[0].mxu0 %v358
      %v521 = vpop.f32.mrb[0].mxu0
      %v522 = vadd.f32 0.0, %v521
      %v523 = vpop.f32.mrb[0].mxu0
      %524 = vmatprep.mubr.f32.mxu0 0.0
      %525 = vmatmul.mubr.f32.gmra.mrb[0].mxu0 %v361
      %v526 = vpop.f32.mrb[0].mxu0
      %v527 = vadd.f32 0.0, %v526
      %v528 = vpop.f32.mrb[0].mxu0
      %529 = vmatprep.mubr.f32.mxu0 0.0
      %530 = vmatmul.mubr.f32.gmra.mrb[0].mxu0 %v364
      %v531 = vpop.f32.mrb[0].mxu0
      %v532 = vadd.f32 0.0, %v531
      %v533 = vpop.f32.mrb[0].mxu0
      %534 = vmatprep.mubr.f32.mxu0 0.0
      %535 = vmatmul.mubr.f32.gmra.mrb[0].mxu0 %v367
      %v536 = vpop.f32.mrb[0].mxu0
      %v537 = vadd.f32 0.0, %v536
      %v538 = vpop.f32.mrb[0].mxu0
      %539 = vmatprep.mubr.f32.mxu0 0.0
      %540 = vmatmul.mubr.f32.gmra.mrb[0].mxu0 %v370
      %v541 = vpop.f32.mrb[0].mxu0
      %v542 = vadd.f32 0.0, %v541
      %v543 = vpop.f32.mrb[0].mxu0
      %544 = vmatprep.mubr.f32.mxu0 0.0
      %545 = vmatmul.mubr.f32.gmra.mrb[0].mxu0 %v373
      %v546 = vpop.f32.mrb[0].mxu0
      %v547 = vadd.f32 0.0, %v546
      %v548 = vpop.f32.mrb[0].mxu0
      %549 = vmatprep.mubr.f32.mxu0 0.0
      %550 = vmatmul.mubr.f32.gmra.mrb[0].mxu0 %v376
      %v551 = vpop.f32.mrb[0].mxu0
      %v552 = vadd.f32 0.0, %v551
      %v553 = vpop.f32.mrb[0].mxu0
      %554 = vmatprep.mubr.f32.mxu0 0.0
      %555 = vmatmul.mubr.f32.gmra.mrb[0].mxu0 %v379
      %v556 = vpop.f32.mrb[0].mxu0
      %v557 = vadd.f32 0.0, %v556
      %v558 = vpop.f32.mrb[0].mxu0
      %559 = vmatprep.mubr.f32.mxu0 0.0
      %560 = vmatmul.mubr.f32.gmra.mrb[0].mxu0 %v382
      %v561 = vpop.f32.mrb[0].mxu0
      %v562 = vadd.f32 0.0, %v561
      %v563 = vpop.f32.mrb[0].mxu0
      %564 = vmatprep.mubr.f32.mxu0 0.0
      %565 = vmatmul.mubr.f32.gmra.mrb[0].mxu0 %v385
      %v566 = vpop.f32.mrb[0].mxu0
      %v567 = vadd.f32 0.0, %v566
      %v568 = vpop.f32.mrb[0].mxu0
      %569 = vmatprep.mubr.f32.mxu0 0.0
      %570 = vmatmul.mubr.f32.gmra.mrb[0].mxu0 %v388
      %v571 = vpop.f32.mrb[0].mxu0
      %v572 = vadd.f32 0.0, %v571
      %v573 = vpop.f32.mrb[0].mxu0
      %574 = vmatprep.mubr.f32.mxu0 0.0
      %575 = vmatmul.mubr.f32.gmra.mrb[0].mxu0 %v391
      %v576 = vpop.f32.mrb[0].mxu0
      %v577 = vadd.f32 0.0, %v576
      %v578 = vpop.f32.mrb[0].mxu0
      %579 = vmatprep.mubr.f32.mxu0 0.0
      %580 = vmatmul.mubr.f32.gmra.mrb[0].mxu0 %v394
      %v581 = vpop.f32.mrb[0].mxu0
      %v582 = vadd.f32 0.0, %v581
      %v583 = vpop.f32.mrb[0].mxu0
      %584 = vmatprep.mubr.f32.mxu0 0.0
      %585 = vmatmul.mubr.f32.gmra.mrb[0].mxu0 %v397
      %v586 = vpop.f32.mrb[0].mxu0
      %v587 = vadd.f32 0.0, %v586
      %v588 = vpop.f32.mrb[0].mxu0
      %589 = vmatprep.mubr.f32.mxu0 0.0
      %590 = vmatmul.mubr.f32.gmra.mrb[0].mxu0 %v400
      %v591 = vpop.f32.mrb[0].mxu0
      %v592 = vadd.f32 0.0, %v591
      %v593 = vpop.f32.mrb[0].mxu0
      %594 = vmatprep.mubr.f32.mxu0 0.0
      %595 = vmatmul.mubr.f32.gmra.mrb[0].mxu0 %v403
      %v596 = vpop.f32.mrb[0].mxu0
      %v597 = vadd.f32 0.0, %v596
      %v598 = vpop.f32.mrb[0].mxu0
      %599 = vmatprep.mubr.f32.mxu0 0.0
      %600 = vmatmul.mubr.f32.gmra.mrb[0].mxu0 %v406
      %v601 = vpop.f32.mrb[0].mxu0
      %v602 = vadd.f32 0.0, %v601
      %v603 = vpop.f32.mrb[0].mxu0
      %604 = vmatprep.mubr.f32.mxu0 0.0
      %605 = vmatmul.mubr.f32.gmra.mrb[0].mxu0 %v409
      %v606 = vpop.f32.mrb[0].mxu0
      %v607 = vadd.f32 0.0, %v606
      %v608 = vpop.f32.mrb[0].mxu0
      %609 = vmatprep.mubr.f32.mxu0 0.0
      %610 = vmatmul.mubr.f32.gmra.mrb[0].mxu0 %v412
      %v611 = vpop.f32.mrb[0].mxu0
      %v612 = vadd.f32 0.0, %v611
      %v613 = vpop.f32.mrb[0].mxu0
      %614 = vmatprep.mubr.f32.mxu0 0.0
      %615 = vmatmul.mubr.f32.gmra.mrb[0].mxu0 %v415
      %v616 = vpop.f32.mrb[0].mxu0
      %v617 = vadd.f32 0.0, %v616
      %v618 = vpop.f32.mrb[0].mxu0
      %619 = vmatprep.mubr.f32.mxu0 0.0
      %620 = vmatmul.mubr.f32.gmra.mrb[0].mxu0 %v418
      %v621 = vpop.f32.mrb[0].mxu0
      %v622 = vadd.f32 0.0, %v621
      %v623 = vpop.f32.mrb[0].mxu0
      %624 = vmatprep.mubr.f32.mxu0 0.0
      %625 = vmatmul.mubr.f32.gmra.mrb[0].mxu0 %v421
      %v626 = vpop.f32.mrb[0].mxu0
      %v627 = vadd.f32 0.0, %v626
      %v628 = vpop.f32.mrb[0].mxu0
      %629 = vmatprep.mubr.f32.mxu0 0.0
      %630 = vmatmul.mubr.f32.gmra.mrb[0].mxu0 %v424
      %v631 = vpop.f32.mrb[0].mxu0
      %v632 = vadd.f32 0.0, %v631
      %v633 = vpop.f32.mrb[0].mxu0
      %634 = vmatprep.mubr.f32.mxu0 0.0
      %635 = vmatmul.mubr.f32.gmra.mrb[0].mxu0 %v427
      %v636 = vpop.f32.mrb[0].mxu0
      %v637 = vadd.f32 0.0, %v636
      %v638 = vpop.f32.mrb[0].mxu0
      %639 = vmatprep.mubr.f32.mxu0 0.0
      %640 = vmatmul.mubr.f32.gmra.mrb[0].mxu0 %v430
      %v641 = vpop.f32.mrb[0].mxu0
      %v642 = vadd.f32 0.0, %v641
      %v643 = vpop.f32.mrb[0].mxu0
      %644 = vmatprep.mubr.f32.mxu0 0.0
      %645 = vmatmul.mubr.f32.gmra.mrb[0].mxu0 %v433
      %v646 = vpop.f32.mrb[0].mxu0
      %v647 = vadd.f32 0.0, %v646
      %v648 = vpop.f32.mrb[0].mxu0
      %649 = vmatprep.mubr.f32.mxu0 0.0
      %650 = vmatmul.mubr.f32.gmra.mrb[0].mxu0 %v436
      %v651 = vpop.f32.mrb[0].mxu0
      %v652 = vadd.f32 0.0, %v651
      %v653 = vpop.f32.mrb[0].mxu0
      %654 = vmatprep.mubr.f32.mxu0 0.0
      %655 = vmatmul.mubr.f32.gmra.mrb[0].mxu0 %v439
      %v656 = vpop.f32.mrb[0].mxu0
      %v657 = vadd.f32 0.0, %v656
      %v658 = vpop.f32.mrb[0].mxu0
      %659 = vmatprep.mubr.f32.mxu0 0.0
      %660 = vmatmul.mubr.f32.gmra.mrb[0].mxu0 %v442
      %v661 = vpop.f32.mrb[0].mxu0
      %v662 = vadd.f32 0.0, %v661
      %v663 = vpop.f32.mrb[0].mxu0
      %664 = vmatprep.mubr.f32.mxu0 0.0
      %665 = vmatmul.mubr.f32.gmra.mrb[0].mxu0 %v445
      %v666 = vpop.f32.mrb[0].mxu0
      %v667 = vadd.f32 0.0, %v666
      %v668 = vpop.f32.mrb[0].mxu0
      %669 = vmatprep.mubr.f32.mxu0 0.0
      %670 = vmatmul.mubr.f32.gmra.mrb[0].mxu0 %v448
      %v671 = vpop.f32.mrb[0].mxu0
      %v672 = vadd.f32 0.0, %v671
      %v673 = vpop.f32.mrb[0].mxu0
      %674 = vdwg.mxu0
      %675 = vst.msk [vmem:[%s213] sm:$0xff] %vm353, %v517
      %676 = vst.msk [vmem:[%s213 + $0x8] sm:$0xff] %vm353, %v522
      %677 = vst.msk [vmem:[%s213 + $0x10] sm:$0xff] %vm353, %v517
      %678 = vst.msk [vmem:[%s213 + $0x18] sm:$0xff] %vm353, %v522
      %679 = vst.msk [vmem:[%s213 + $0x20] sm:$0xff] %vm353, %v527
      %680 = vst.msk [vmem:[%s213 + $0x28] sm:$0xff] %vm353, %v532
      %681 = vst.msk [vmem:[%s213 + $0x30] sm:$0xff] %vm353, %v527
      %682 = vst.msk [vmem:[%s213 + $0x38] sm:$0xff] %vm353, %v532
      %683 = vst.msk [vmem:[%s213 + $0x40] sm:$0xff] %vm353, %v537
      %684 = vst.msk [vmem:[%s213 + $0x48] sm:$0xff] %vm353, %v542
      %685 = vst.msk [vmem:[%s213 + $0x50] sm:$0xff] %vm353, %v537
      %686 = vst.msk [vmem:[%s213 + $0x58] sm:$0xff] %vm353, %v542
      %687 = vst.msk [vmem:[%s213 + $0x60] sm:$0xff] %vm353, %v547
      %688 = vst.msk [vmem:[%s213 + $0x68] sm:$0xff] %vm353, %v552
      %689 = vst.msk [vmem:[%s213 + $0x70] sm:$0xff] %vm353, %v547
      %690 = vst.msk [vmem:[%s213 + $0x78] sm:$0xff] %vm353, %v552
      %691 = vst.msk [vmem:[%s213 + $0x80] sm:$0xff] %vm353, %v557
      %692 = vst.msk [vmem:[%s213 + $0x88] sm:$0xff] %vm353, %v562
      %693 = vst.msk [vmem:[%s213 + $0x90] sm:$0xff] %vm353, %v557
      %694 = vst.msk [vmem:[%s213 + $0x98] sm:$0xff] %vm353, %v562
      %695 = vst.msk [vmem:[%s213 + $0xa0] sm:$0xff] %vm353, %v567
      %696 = vst.msk [vmem:[%s213 + $0xa8] sm:$0xff] %vm353, %v572
      %697 = vst.msk [vmem:[%s213 + $0xb0] sm:$0xff] %vm353, %v567
      %698 = vst.msk [vmem:[%s213 + $0xb8] sm:$0xff] %vm353, %v572
      %699 = vst.msk [vmem:[%s213 + $0xc0] sm:$0xff] %vm353, %v577
      %700 = vst.msk [vmem:[%s213 + $0xc8] sm:$0xff] %vm353, %v582
      %701 = vst.msk [vmem:[%s213 + $0xd0] sm:$0xff] %vm353, %v577
      %702 = vst.msk [vmem:[%s213 + $0xd8] sm:$0xff] %vm353, %v582
      %703 = vst.msk [vmem:[%s213 + $0xe0] sm:$0xff] %vm353, %v587
      %704 = vst.msk [vmem:[%s213 + $0xe8] sm:$0xff] %vm353, %v592
      %705 = vst.msk [vmem:[%s213 + $0xf0] sm:$0xff] %vm353, %v587
      %706 = vst.msk [vmem:[%s213 + $0xf8] sm:$0xff] %vm353, %v592
      %707 = vst.msk [vmem:[%s213 + $0x100] sm:$0xff] %vm353, %v597
      %708 = vst.msk [vmem:[%s213 + $0x108] sm:$0xff] %vm353, %v602
      %709 = vst.msk [vmem:[%s213 + $0x110] sm:$0xff] %vm353, %v597
      %710 = vst.msk [vmem:[%s213 + $0x118] sm:$0xff] %vm353, %v602
      %711 = vst.msk [vmem:[%s213 + $0x120] sm:$0xff] %vm353, %v607
      %712 = vst.msk [vmem:[%s213 + $0x128] sm:$0xff] %vm353, %v612
      %713 = vst.msk [vmem:[%s213 + $0x130] sm:$0xff] %vm353, %v607
      %714 = vst.msk [vmem:[%s213 + $0x138] sm:$0xff] %vm353, %v612
      %715 = vst.msk [vmem:[%s213 + $0x140] sm:$0xff] %vm353, %v617
      %716 = vst.msk [vmem:[%s213 + $0x148] sm:$0xff] %vm353, %v622
      %717 = vst.msk [vmem:[%s213 + $0x150] sm:$0xff] %vm353, %v617
      %718 = vst.msk [vmem:[%s213 + $0x158] sm:$0xff] %vm353, %v622
      %719 = vst.msk [vmem:[%s213 + $0x160] sm:$0xff] %vm353, %v627
      %720 = vst.msk [vmem:[%s213 + $0x168] sm:$0xff] %vm353, %v632
      %721 = vst.msk [vmem:[%s213 + $0x170] sm:$0xff] %vm353, %v627
      %722 = vst.msk [vmem:[%s213 + $0x178] sm:$0xff] %vm353, %v632
      %723 = vst.msk [vmem:[%s213 + $0x180] sm:$0xff] %vm353, %v637
      %724 = vst.msk [vmem:[%s213 + $0x188] sm:$0xff] %vm353, %v642
      %725 = vst.msk [vmem:[%s213 + $0x190] sm:$0xff] %vm353, %v637
      %726 = vst.msk [vmem:[%s213 + $0x198] sm:$0xff] %vm353, %v642
      %727 = vst.msk [vmem:[%s213 + $0x1a0] sm:$0xff] %vm353, %v647
      %728 = vst.msk [vmem:[%s213 + $0x1a8] sm:$0xff] %vm353, %v652
      %729 = vst.msk [vmem:[%s213 + $0x1b0] sm:$0xff] %vm353, %v647
      %730 = vst.msk [vmem:[%s213 + $0x1b8] sm:$0xff] %vm353, %v652
      %731 = vst.msk [vmem:[%s213 + $0x1c0] sm:$0xff] %vm353, %v657
      %732 = vst.msk [vmem:[%s213 + $0x1c8] sm:$0xff] %vm353, %v662
      %733 = vst.msk [vmem:[%s213 + $0x1d0] sm:$0xff] %vm353, %v657
      %734 = vst.msk [vmem:[%s213 + $0x1d8] sm:$0xff] %vm353, %v662
      %735 = vst.msk [vmem:[%s213 + $0x1e0] sm:$0xff] %vm353, %v667
      %736 = vst.msk [vmem:[%s213 + $0x1e8] sm:$0xff] %vm353, %v672
      %737 = vst.msk [vmem:[%s213 + $0x1f0] sm:$0xff] %vm353, %v667
      %738 = vst.msk [vmem:[%s213 + $0x1f8] sm:$0xff] %vm353, %v672
      %s739 = smul.u32 16, %s19
      %p740 = scmp.lt.s32.totalorder %s18, 1
      %s741 = scalar_select %p740, %s18, 1
      %p742 = scmp.lt.s32.totalorder %s739, 15
      %s743 = scalar_select %p742, %s739, 15
      %s744 = smul.addr %s743, 4
      %s745 = smul.addr %s741, 64
      %s746 = sadd.s32 %s744, %s745
      %s747 = smul.addr %s746, 8
      %s748 = scalar_lea.vmem %s3, %s747
      // Predicated region
      $region33: #{tpu_custom_call.1} parent=31 // pred_check
        %p749 = pneg %p116
      $region34: #{tpu_custom_call.1} parent=31 // pred_check_branch
        %751 = sbr.rel (%p749) target = $region36
      $region35: #{tpu_custom_call.1} parent=31 // pred_region
        %s752 = smul.u32 16, %s19
      $region36: #{tpu_custom_call.1} parent=31 // pred_fallthru
        _
    $region32: #{tpu_custom_call.1} parent=5 // pred_fallthru
      _
    %p753 = scmp.le.s32.totalorder 2, %s9
    // Predicated region
    $region37: #{tpu_custom_call.1} parent=5 // pred_check
      %p754 = pneg %p753
    $region38: #{tpu_custom_call.1} parent=5 // pred_check_branch
      %756 = sbr.rel (%p754) target = $region40
    $region39: #{tpu_custom_call.1} parent=5 // pred_region
      %s757 = ssub.s32 %s9, 2
      // Predicated region
      $region41: #{tpu_custom_call.1} parent=39 // pred_check
        %p758 = pneg %p122
      $region42: #{tpu_custom_call.1} parent=39 // pred_check_branch
        %760 = sbr.rel (%p758) target = $region44
      $region43: #{tpu_custom_call.1} parent=39 // pred_region
        %s761 = smul.u32 16, %s21
        %p762 = scmp.lt.s32.totalorder %s20, 1
        %s763 = scalar_select %p762, %s20, 1
        %p764 = scmp.lt.s32.totalorder %s761, 15
        %s765 = scalar_select %p764, %s761, 15
        %s766 = smul.addr %s765, 4
        %s767 = smul.addr %s763, 64
        %s768 = sadd.s32 %s766, %s767
        %s769 = smul.addr %s768, 8
        %s770 = scalar_lea.vmem %s3, %s769
      $region44: #{tpu_custom_call.1} parent=39 // pred_fallthru
        _
    $region40: #{tpu_custom_call.1} parent=5 // pred_fallthru
      _
  $region6: #{tpu_custom_call.1} parent=0 // loop_footer
    %s13 = sadd.s32 1, %s9
  $region7: #{tpu_custom_call.1} parent=0 // loop_footer_branch
    %8 = sbr.rel target = $region3
  $region8: #{tpu_custom_call.1} parent=0 // loop_exit
    _

</llo_original>
